<compile_context>
chip_gen: v7x
topology: tpu7x:2x2x1
jax: 0.10.0
libtpu: 0.0.40
codegen_flags: <defaults>
</compile_context>

<pallas_src>
import jax
import jax.numpy as jnp
from jax import lax
from jax.experimental import pallas as pl
from jax.experimental.pallas import tpu as pltpu


def embed_kernel(x_ref, w_ref, b_ref, o_ref):
    # x_ref: (TB, D_in) f32
    # w_ref: (D_out, D_in) f32   (PyTorch nn.Linear layout, no pre-transpose)
    # b_ref: (1, D_out) f32
    # o_ref: (TB, D_out) f32
    y = lax.dot_general(
        x_ref[...], w_ref[...],
        dimension_numbers=(((1,), (1,)), ((), ())),   # x @ w.T on the MXU
        preferred_element_type=jnp.float32,
    )
    y = y + b_ref[...]
    # Normalize(power=2): y / sqrt(sum(y^2, axis=1, keepdim=True)).
    # No eps, exactly like the reference Normalize.
    inv = lax.rsqrt(jnp.sum(y * y, axis=1, keepdims=True))   # XLU reduce + EUP rsqrt
    o_ref[...] = (y * inv).astype(o_ref.dtype)


def _round_up(x, m):
    return (x + m - 1) // m * m


def embed_forward(x, weight, bias, *, tb_max=512):
    """Embed forward.

    x:      (B, C, H, W) or (B, D_in) float32
    weight: (D_out, D_in) float32  (PyTorch nn.Linear layout)
    bias:   (D_out,) float32
    returns (B, D_out) float32, L2-normalized along axis 1.
    """
    B = x.shape[0]
    x_flat = x.reshape(B, -1)                     # x.view(B, -1)
    d_in = x_flat.shape[1]
    d_out = weight.shape[0]

    if B <= tb_max:
        # Single grid step: block == full batch dim, so no (8,128) divisibility
        # requirement and no padding / per-step overhead.  Right choice for
        # single-TC chips (v5e/v6e); fine on v7x at this tiny size too.
        tb, b_pad = B, B
    else:
        # Tile the batch; pad only to f32 sublane alignment (8 rows), not to a
        # multiple of tb.  Pallas masks the partial last block's writes.
        tb = tb_max
        b_pad = _round_up(B, 8)

    xp = x_flat if b_pad == B else jnp.pad(x_flat, ((0, b_pad - B), (0, 0)))
    b2d = bias.reshape(1, d_out).astype(jnp.float32)

    out = pl.pallas_call(
        embed_kernel,
        out_shape=jax.ShapeDtypeStruct((b_pad, d_out), x_flat.dtype),
        grid_spec=pltpu.PrefetchScalarGridSpec(
            num_scalar_prefetch=0,
            grid=(pl.cdiv(b_pad, tb),),
            in_specs=[
                pl.BlockSpec((tb, d_in), lambda i: (i, 0)),
                # Grid-constant operands (weight, bias): constant index map.
                pl.BlockSpec((d_out, d_in), lambda i: (0, 0)),
                pl.BlockSpec((1, d_out), lambda i: (0, 0)),
            ],
            out_specs=pl.BlockSpec((tb, d_out), lambda i: (i, 0)),
        ),
        compiler_params=pltpu.CompilerParams(
            # Batch tiles are independent -> shard across v7x's two TCs when
            # the grid has >1 step; no-op for the single-step case.
            dimension_semantics=("parallel",),
        ),
    )(xp, weight, b2d)

    return out[:B] if b_pad != B else out


if __name__ == "__main__":
    # Small shapes consistent with the module defaults:
    # x (2, 4, 16, 16) flattens to (2, 1024) = Linear(dim_in=1024, dim_out=128).
    B, C, H, W = 2, 4, 16, 16
    dim_in = C * H * W          # 1024
    dim_out = 128

    key = jax.random.PRNGKey(0)
    kx, kw, kb = jax.random.split(key, 3)

    x = jax.random.normal(kx, (B, C, H, W), dtype=jnp.float32)

    # Deterministic param init mimicking nn.Linear default (uniform +-1/sqrt(dim_in)).
    bound = 1.0 / (dim_in ** 0.5)
    weight = jax.random.uniform(kw, (dim_out, dim_in), jnp.float32, -bound, bound)
    bias = jax.random.uniform(kb, (dim_out,), jnp.float32, -bound, bound)

    out = jax.jit(embed_forward)(x, weight, bias)
    out = jax.block_until_ready(out)

    # Pure-JAX f32 reference (highest-precision matmul).
    y_ref = jnp.dot(x.reshape(B, -1), weight.T,
                    precision=jax.lax.Precision.HIGHEST) + bias
    ref = y_ref / jnp.sqrt(jnp.sum(y_ref * y_ref, axis=1, keepdims=True))

    assert out.shape == (B, dim_out)
    assert bool(jnp.all(jnp.isfinite(out)))
    # Tolerance stays robust to MXU f32 rounding; any structural bug produces
    # errors orders of magnitude larger than this.
    assert jnp.allclose(out, ref, atol=1e-3, rtol=1e-3), \
        float(jnp.max(jnp.abs(out - ref)))

    print("KERNEL_OK")
</pallas_src>

<mosaic_0001>
module attributes {stable_mosaic.version = 11 : i64} {
  func.func @embed_kernel(%arg0: i32, %arg1: memref<2x1024xf32, #tpu.memory_space<vmem>>, %arg2: memref<128x1024xf32, #tpu.memory_space<vmem>>, %arg3: memref<1x128xf32, #tpu.memory_space<vmem>>, %arg4: memref<2x128xf32, #tpu.memory_space<vmem>>) attributes {dimension_semantics = [#tpu.dimension_semantics<parallel>], iteration_bounds = array<i64: 1>, scalar_prefetch = 0 : i64, scratch_operands = 0 : i64, tpu.core_type = #tpu.core_type<tc>, window_params = [{transform_indices = @transform_0, window_bounds = array<i64: 2, 1024>}, {pipeline_mode = #tpu.pipeline_mode<synchronous>, transform_indices = @transform_1, window_bounds = array<i64: 128, 1024>}, {pipeline_mode = #tpu.pipeline_mode<synchronous>, transform_indices = @transform_2, window_bounds = array<i64: 1, 128>}, {transform_indices = @transform_3, window_bounds = array<i64: 2, 128>}]} {
    %c0 = arith.constant 0 : index
    %c0_0 = arith.constant 0 : index
    %0 = vector.load %arg1[%c0, %c0_0] : memref<2x1024xf32, #tpu.memory_space<vmem>>, vector<2x1024xf32>
    %c0_1 = arith.constant 0 : index
    %c0_2 = arith.constant 0 : index
    %1 = vector.load %arg2[%c0_1, %c0_2] : memref<128x1024xf32, #tpu.memory_space<vmem>>, vector<128x1024xf32>
    %cst = arith.constant dense<0.000000e+00> : vector<2x128xf32>
    %2 = tpu.matmul %0, %1, %cst {dimension_numbers = #tpu.dot_dimension_numbers<[1], [1], [0], [0], [0, 0, 1, 0], [], []>} : vector<2x1024xf32>, vector<128x1024xf32>, vector<2x128xf32> -> vector<2x128xf32>
    %c0_3 = arith.constant 0 : index
    %c0_4 = arith.constant 0 : index
    %3 = vector.load %arg3[%c0_3, %c0_4] : memref<1x128xf32, #tpu.memory_space<vmem>>, vector<1x128xf32>
    %4 = vector.broadcast %3 : vector<1x128xf32> to vector<2x128xf32>
    %5 = arith.addf %2, %4 : vector<2x128xf32>
    %6 = arith.mulf %5, %5 : vector<2x128xf32>
    %cst_5 = arith.constant dense<0.000000e+00> : vector<2xf32>
    %7 = vector.multi_reduction <add>, %6, %cst_5 [1] : vector<2x128xf32> to vector<2xf32>
    %8 = vector.shape_cast %7 : vector<2xf32> to vector<2x1xf32>
    %9 = math.rsqrt %8 : vector<2x1xf32>
    %10 = vector.broadcast %9 : vector<2x1xf32> to vector<2x128xf32>
    %11 = arith.mulf %5, %10 : vector<2x128xf32>
    %c0_6 = arith.constant 0 : index
    %c0_7 = arith.constant 0 : index
    %12 = vector.load %arg4[%c0_6, %c0_7] : memref<2x128xf32, #tpu.memory_space<vmem>>, vector<2x128xf32>
    tpu.vector_store %arg4[%c0_6, %c0_7], %11 {strides = array<i32>} : memref<2x128xf32, #tpu.memory_space<vmem>>, vector<2x128xf32>,
    return
  }
  func.func @transform_0(%arg0: i32) -> (i32, i32) {
    %c0_i32 = arith.constant 0 : i32
    %c0_i32_0 = arith.constant 0 : i32
    return %arg0, %c0_i32 : i32, i32
  }
  func.func @transform_1(%arg0: i32) -> (i32, i32) {
    %c0_i32 = arith.constant 0 : i32
    %c0_i32_0 = arith.constant 0 : i32
    %c0_i32_1 = arith.constant 0 : i32
    return %c0_i32, %c0_i32_0 : i32, i32
  }
  func.func @transform_2(%arg0: i32) -> (i32, i32) {
    %c0_i32 = arith.constant 0 : i32
    %c0_i32_0 = arith.constant 0 : i32
    %c0_i32_1 = arith.constant 0 : i32
    return %c0_i32, %c0_i32_0 : i32, i32
  }
  func.func @transform_3(%arg0: i32) -> (i32, i32) {
    %c0_i32 = arith.constant 0 : i32
    %c0_i32_0 = arith.constant 0 : i32
    return %arg0, %c0_i32 : i32, i32
  }
}

</mosaic_0001>

<llo_original>
// kernel: embed_forward.1
$region0: #{embed_forward.1}
  #allocation0 [shape = 'u32[]', space=smem, size = 0x4, offset = 0x4, fixed_abs, tag = 'smem constant byte address 0x4 - core index']
  #allocation1 [shape = 'u32[144,128]{1,0:T(1,128)}', space=vmem, size = 0x12000, scoped, tag = 'internal scratch']
  %s0 = inlined_call_operand.vmem [shape: f32[2,1024], index: 0, kind: input, shape index: {}]
  %s1 = inlined_call_operand.hbm [shape: f32[128,1024], index: 1, kind: input, shape index: {}]
  %s2 = inlined_call_operand.vmem [shape: f32[1,128], index: 2, kind: input, shape index: {}]
  %s3 = inlined_call_operand.hbm [shape: f32[2,128], index: 3, kind: output, shape index: {}]
  %s4 = sld [smem:[#allocation0]]
  $region26: #{embed_forward.1} parent=0
    _
  %s6 = ssub.s32 1, %s4
  %s7 = scalar_select 0, %s6, %s4
  $region1: #{embed_forward.1} parent=0
    #allocation2 [shape = 'u8[524288]{0}', space=vmem, size = 0x80000, scoped, tag = 'input window, operand 1, single buffered']
    #allocation3 [shape = 's32[1]{0}', space=sflag, size = 0x4, scoped, tag = 'scoped memory for embed_forward.1']
    #allocation4 [shape = 's32[1]{0}', space=sflag, size = 0x4, scoped, tag = 'scoped memory for embed_forward.1']
    #allocation5 [shape = 'u8[1024]{0}', space=vmem, size = 0x400, scoped, tag = 'output window, operand 0, single buffered']
    %8 = vsyncpa [#allocation3], 0
    %9 = vsyncpa [#allocation4], 0
    // Predicated region
    $region2: #{embed_forward.1} parent=1 // pred_check
      _
    $region3: #{embed_forward.1} parent=1 // pred_check_branch
      %11 = sbr.rel (0) target = $region5
    $region4: #{embed_forward.1} parent=1 // pred_region
      _
    $region5: #{embed_forward.1} parent=1 // pred_fallthru
      _
    // Predicated region
    $region6: #{embed_forward.1} parent=1 // pred_check
      _
    $region7: #{embed_forward.1} parent=1 // pred_check_branch
      %13 = sbr.rel (0) target = $region9
    $region8: #{embed_forward.1} parent=1 // pred_region
      %s15 = ssub.s32 16384, 16384
      %16 = vsyncadd [#allocation3], %s15
      %s17 = sshll.u32 [#allocation2], 4
      %s18 = int_to_ptr.vmem [resolvable:$true] %s17
      %23 = dma.hbm_to_vmem [thread:$0]  %s1, 16384, %s18, [#allocation3], 1024, 1024, 64
    $region9: #{embed_forward.1} parent=1 // pred_fallthru
      _
    // Predicated region
    $region10: #{embed_forward.1} parent=1 // pred_check
      _
    $region11: #{embed_forward.1} parent=1 // pred_check_branch
      %25 = sbr.rel (0) target = $region13
    $region12: #{embed_forward.1} parent=1 // pred_region
      _
    $region13: #{embed_forward.1} parent=1 // pred_fallthru
      _
    // Predicated region
    $region14: #{embed_forward.1} parent=1 // pred_check
      _
    $region15: #{embed_forward.1} parent=1 // pred_check_branch
      %27 = sbr.rel (0) target = $region17
    $region16: #{embed_forward.1} parent=1 // pred_region
      %28 = dma.done [#allocation3], 16384
    $region17: #{embed_forward.1} parent=1 // pred_fallthru
      _
    %v29 = vld [vmem:[%s0] sm:$0xff]
    %v30 = vld [vmem:[%s0 + $0x8] sm:$0xff]
    %v31 = vld [vmem:[#allocation2] sm:$0xff]
    %v32 = vld [vmem:[#allocation2 + $0x8] sm:$0xff]
    %v33 = vld [vmem:[#allocation2 + $0x10] sm:$0xff]
    %v34 = vld [vmem:[#allocation2 + $0x18] sm:$0xff]
    %v35 = vld [vmem:[#allocation2 + $0x20] sm:$0xff]
    %v36 = vld [vmem:[#allocation2 + $0x28] sm:$0xff]
    %v37 = vld [vmem:[#allocation2 + $0x30] sm:$0xff]
    %v38 = vld [vmem:[#allocation2 + $0x38] sm:$0xff]
    %v39 = vld [vmem:[#allocation2 + $0x40] sm:$0xff]
    %v40 = vld [vmem:[#allocation2 + $0x48] sm:$0xff]
    %v41 = vld [vmem:[#allocation2 + $0x50] sm:$0xff]
    %v42 = vld [vmem:[#allocation2 + $0x58] sm:$0xff]
    %v43 = vld [vmem:[#allocation2 + $0x60] sm:$0xff]
    %v44 = vld [vmem:[#allocation2 + $0x68] sm:$0xff]
    %v45 = vld [vmem:[#allocation2 + $0x70] sm:$0xff]
    %v46 = vld [vmem:[#allocation2 + $0x78] sm:$0xff]
    %v47 = vld [vmem:[#allocation2 + $0x80] sm:$0xff]
    %v48 = vld [vmem:[#allocation2 + $0x88] sm:$0xff]
    %v49 = vld [vmem:[#allocation2 + $0x90] sm:$0xff]
    %v50 = vld [vmem:[#allocation2 + $0x98] sm:$0xff]
    %v51 = vld [vmem:[#allocation2 + $0xa0] sm:$0xff]
    %v52 = vld [vmem:[#allocation2 + $0xa8] sm:$0xff]
    %v53 = vld [vmem:[#allocation2 + $0xb0] sm:$0xff]
    %v54 = vld [vmem:[#allocation2 + $0xb8] sm:$0xff]
    %v55 = vld [vmem:[#allocation2 + $0xc0] sm:$0xff]
    %v56 = vld [vmem:[#allocation2 + $0xc8] sm:$0xff]
    %v57 = vld [vmem:[#allocation2 + $0xd0] sm:$0xff]
    %v58 = vld [vmem:[#allocation2 + $0xd8] sm:$0xff]
    %v59 = vld [vmem:[#allocation2 + $0xe0] sm:$0xff]
    %v60 = vld [vmem:[#allocation2 + $0xe8] sm:$0xff]
    %v61 = vld [vmem:[#allocation2 + $0xf0] sm:$0xff]
    %v62 = vld [vmem:[#allocation2 + $0xf8] sm:$0xff]
    %v63 = vld [vmem:[#allocation2 + $0x100] sm:$0xff]
    %v64 = vld [vmem:[#allocation2 + $0x108] sm:$0xff]
    %v65 = vld [vmem:[#allocation2 + $0x110] sm:$0xff]
    %v66 = vld [vmem:[#allocation2 + $0x118] sm:$0xff]
    %v67 = vld [vmem:[#allocation2 + $0x120] sm:$0xff]
    %v68 = vld [vmem:[#allocation2 + $0x128] sm:$0xff]
    %v69 = vld [vmem:[#allocation2 + $0x130] sm:$0xff]
    %v70 = vld [vmem:[#allocation2 + $0x138] sm:$0xff]
    %v71 = vld [vmem:[#allocation2 + $0x140] sm:$0xff]
    %v72 = vld [vmem:[#allocation2 + $0x148] sm:$0xff]
    %v73 = vld [vmem:[#allocation2 + $0x150] sm:$0xff]
    %v74 = vld [vmem:[#allocation2 + $0x158] sm:$0xff]
    %v75 = vld [vmem:[#allocation2 + $0x160] sm:$0xff]
    %v76 = vld [vmem:[#allocation2 + $0x168] sm:$0xff]
    %v77 = vld [vmem:[#allocation2 + $0x170] sm:$0xff]
    %v78 = vld [vmem:[#allocation2 + $0x178] sm:$0xff]
    %v79 = vld [vmem:[#allocation2 + $0x180] sm:$0xff]
    %v80 = vld [vmem:[#allocation2 + $0x188] sm:$0xff]
    %v81 = vld [vmem:[#allocation2 + $0x190] sm:$0xff]
    %v82 = vld [vmem:[#allocation2 + $0x198] sm:$0xff]
    %v83 = vld [vmem:[#allocation2 + $0x1a0] sm:$0xff]
    %v84 = vld [vmem:[#allocation2 + $0x1a8] sm:$0xff]
    %v85 = vld [vmem:[#allocation2 + $0x1b0] sm:$0xff]
    %v86 = vld [vmem:[#allocation2 + $0x1b8] sm:$0xff]
    %v87 = vld [vmem:[#allocation2 + $0x1c0] sm:$0xff]
    %v88 = vld [vmem:[#allocation2 + $0x1c8] sm:$0xff]
    %v89 = vld [vmem:[#allocation2 + $0x1d0] sm:$0xff]
    %v90 = vld [vmem:[#allocation2 + $0x1d8] sm:$0xff]
    %v91 = vld [vmem:[#allocation2 + $0x1e0] sm:$0xff]
    %v92 = vld [vmem:[#allocation2 + $0x1e8] sm:$0xff]
    %v93 = vld [vmem:[#allocation2 + $0x1f0] sm:$0xff]
    %v94 = vld [vmem:[#allocation2 + $0x1f8] sm:$0xff]
    %v95 = vld [vmem:[#allocation2 + $0x200] sm:$0xff]
    %v96 = vld [vmem:[#allocation2 + $0x208] sm:$0xff]
    %v97 = vld [vmem:[#allocation2 + $0x210] sm:$0xff]
    %v98 = vld [vmem:[#allocation2 + $0x218] sm:$0xff]
    %v99 = vld [vmem:[#allocation2 + $0x220] sm:$0xff]
    %v100 = vld [vmem:[#allocation2 + $0x228] sm:$0xff]
    %v101 = vld [vmem:[#allocation2 + $0x230] sm:$0xff]
    %v102 = vld [vmem:[#allocation2 + $0x238] sm:$0xff]
    %v103 = vld [vmem:[#allocation2 + $0x240] sm:$0xff]
    %v104 = vld [vmem:[#allocation2 + $0x248] sm:$0xff]
    %v105 = vld [vmem:[#allocation2 + $0x250] sm:$0xff]
    %v106 = vld [vmem:[#allocation2 + $0x258] sm:$0xff]
    %v107 = vld [vmem:[#allocation2 + $0x260] sm:$0xff]
    %v108 = vld [vmem:[#allocation2 + $0x268] sm:$0xff]
    %v109 = vld [vmem:[#allocation2 + $0x270] sm:$0xff]
    %v110 = vld [vmem:[#allocation2 + $0x278] sm:$0xff]
    %v111 = vld [vmem:[#allocation2 + $0x280] sm:$0xff]
    %v112 = vld [vmem:[#allocation2 + $0x288] sm:$0xff]
    %v113 = vld [vmem:[#allocation2 + $0x290] sm:$0xff]
    %v114 = vld [vmem:[#allocation2 + $0x298] sm:$0xff]
    %v115 = vld [vmem:[#allocation2 + $0x2a0] sm:$0xff]
    %v116 = vld [vmem:[#allocation2 + $0x2a8] sm:$0xff]
    %v117 = vld [vmem:[#allocation2 + $0x2b0] sm:$0xff]
    %v118 = vld [vmem:[#allocation2 + $0x2b8] sm:$0xff]
    %v119 = vld [vmem:[#allocation2 + $0x2c0] sm:$0xff]
    %v120 = vld [vmem:[#allocation2 + $0x2c8] sm:$0xff]
    %v121 = vld [vmem:[#allocation2 + $0x2d0] sm:$0xff]
    %v122 = vld [vmem:[#allocation2 + $0x2d8] sm:$0xff]
    %v123 = vld [vmem:[#allocation2 + $0x2e0] sm:$0xff]
    %v124 = vld [vmem:[#allocation2 + $0x2e8] sm:$0xff]
    %v125 = vld [vmem:[#allocation2 + $0x2f0] sm:$0xff]
    %v126 = vld [vmem:[#allocation2 + $0x2f8] sm:$0xff]
    %v127 = vld [vmem:[#allocation2 + $0x300] sm:$0xff]
    %v128 = vld [vmem:[#allocation2 + $0x308] sm:$0xff]
    %v129 = vld [vmem:[#allocation2 + $0x310] sm:$0xff]
    %v130 = vld [vmem:[#allocation2 + $0x318] sm:$0xff]
    %v131 = vld [vmem:[#allocation2 + $0x320] sm:$0xff]
    %v132 = vld [vmem:[#allocation2 + $0x328] sm:$0xff]
    %v133 = vld [vmem:[#allocation2 + $0x330] sm:$0xff]
    %v134 = vld [vmem:[#allocation2 + $0x338] sm:$0xff]
    %v135 = vld [vmem:[#allocation2 + $0x340] sm:$0xff]
    %v136 = vld [vmem:[#allocation2 + $0x348] sm:$0xff]
    %v137 = vld [vmem:[#allocation2 + $0x350] sm:$0xff]
    %v138 = vld [vmem:[#allocation2 + $0x358] sm:$0xff]
    %v139 = vld [vmem:[#allocation2 + $0x360] sm:$0xff]
    %v140 = vld [vmem:[#allocation2 + $0x368] sm:$0xff]
    %v141 = vld [vmem:[#allocation2 + $0x370] sm:$0xff]
    %v142 = vld [vmem:[#allocation2 + $0x378] sm:$0xff]
    %v143 = vld [vmem:[#allocation2 + $0x380] sm:$0xff]
    %v144 = vld [vmem:[#allocation2 + $0x388] sm:$0xff]
    %v145 = vld [vmem:[#allocation2 + $0x390] sm:$0xff]
    %v146 = vld [vmem:[#allocation2 + $0x398] sm:$0xff]
    %v147 = vld [vmem:[#allocation2 + $0x3a0] sm:$0xff]
    %v148 = vld [vmem:[#allocation2 + $0x3a8] sm:$0xff]
    %v149 = vld [vmem:[#allocation2 + $0x3b0] sm:$0xff]
    %v150 = vld [vmem:[#allocation2 + $0x3b8] sm:$0xff]
    %v151 = vld [vmem:[#allocation2 + $0x3c0] sm:$0xff]
    %v152 = vld [vmem:[#allocation2 + $0x3c8] sm:$0xff]
    %v153 = vld [vmem:[#allocation2 + $0x3d0] sm:$0xff]
    %v154 = vld [vmem:[#allocation2 + $0x3d8] sm:$0xff]
    %v155 = vld [vmem:[#allocation2 + $0x3e0] sm:$0xff]
    %v156 = vld [vmem:[#allocation2 + $0x3e8] sm:$0xff]
    %v157 = vld [vmem:[#allocation2 + $0x3f0] sm:$0xff]
    %v158 = vld [vmem:[#allocation2 + $0x3f8] sm:$0xff]
    %v159 = vld [vmem:[%s2] sm:$0x1]
    %v161 = vlaneseq
    %v162 = vshrl.u32 %v161, 7
    %v163 = vsub.s32 0, %v162
    %v164 = vrot.slane %v159, %v163
    %v168 = vcombine.high %v29, %v29
    %v170 = vunpack.c.l.s4 1983009808
    %v171 = vunpack.c.0.s8 %v170
    %v172 = vlaneseq
    %v173 = vshrl.u32 %v172, 7
    %v174 = vsub.s32 %v171, %v173
    %v175 = vrot.slane %v29, %v174
    %v177 = vunpack.c.l.s4 1983009808
    %v178 = vunpack.c.0.s8 %v177
    %v179 = vlaneseq
    %v180 = vshrl.u32 %v179, 7
    %v181 = vsub.s32 %v178, %v180
    %v182 = vrot.slane %v168, %v181
    %v183 = vcombine.high %v175, %v175
    %v184 = vcombine.high %v182, %v182
    %v185 = vcombine.high %v30, %v30
    %v187 = vunpack.c.l.s4 1983009808
    %v188 = vunpack.c.0.s8 %v187
    %v189 = vlaneseq
    %v190 = vshrl.u32 %v189, 7
    %v191 = vsub.s32 %v188, %v190
    %v192 = vrot.slane %v30, %v191
    %v194 = vunpack.c.l.s4 1983009808
    %v195 = vunpack.c.0.s8 %v194
    %v196 = vlaneseq
    %v197 = vshrl.u32 %v196, 7
    %v198 = vsub.s32 %v195, %v197
    %v199 = vrot.slane %v185, %v198
    %v200 = vcombine.high %v192, %v192
    %v201 = vcombine.high %v199, %v199
    %210 = vmatprep.subr.mxu0 %v32
    %211 = vmatpush1.xpose.msra.mxu0 %v31
    %212 = vmatprep.subr.mxu0 %v40
    %213 = vmatpush1.xpose.msra.mxu0 %v39
    %214 = vmatprep.subr.mxu0 %v48
    %215 = vmatpush1.xpose.msra.mxu0 %v47
    %216 = vmatprep.subr.mxu0 %v56
    %217 = vmatpush1.xpose.msra.mxu0 %v55
    %218 = vmatprep.subr.mxu0 %v64
    %219 = vmatpush1.xpose.msra.mxu0 %v63
    %220 = vmatprep.subr.mxu0 %v72
    %221 = vmatpush1.xpose.msra.mxu0 %v71
    %222 = vmatprep.subr.mxu0 %v80
    %223 = vmatpush1.xpose.msra.mxu0 %v79
    %224 = vmatprep.subr.mxu0 %v88
    %225 = vmatpush1.xpose.msra.mxu0 %v87
    %226 = vmatprep.subr.mxu0 %v96
    %227 = vmatpush1.xpose.msra.mxu0 %v95
    %228 = vmatprep.subr.mxu0 %v104
    %229 = vmatpush1.xpose.msra.mxu0 %v103
    %230 = vmatprep.subr.mxu0 %v112
    %231 = vmatpush1.xpose.msra.mxu0 %v111
    %232 = vmatprep.subr.mxu0 %v120
    %233 = vmatpush1.xpose.msra.mxu0 %v119
    %234 = vmatprep.subr.mxu0 %v128
    %235 = vmatpush1.xpose.msra.mxu0 %v127
    %236 = vmatprep.subr.mxu0 %v136
    %237 = vmatpush1.xpose.msra.mxu0 %v135
    %238 = vmatprep.subr.mxu0 %v144
    %239 = vmatpush1.xpose.msra.mxu0 %v143
    %240 = vmatprep.subr.mxu0 %v152
    %241 = vmatpush1.xpose.msra.mxu0 %v151
    %242 = vmatprep.subr.mxu0 0.0
    %243 = vmatpush1.xpose.msra.mxu0 0.0
    %244 = vmatprep.subr.mxu0 0.0
    %245 = vmatpush1.xpose.msra.mxu0 0.0
    %246 = vmatprep.subr.mxu0 0.0
    %247 = vmatpush1.xpose.msra.mxu0 0.0
    %248 = vmatprep.subr.mxu0 0.0
    %249 = vmatpush1.xpose.msra.mxu0 0.0
    %250 = vmatprep.subr.mxu0 0.0
    %251 = vmatpush1.xpose.msra.mxu0 0.0
    %252 = vmatprep.subr.mxu0 0.0
    %253 = vmatpush1.xpose.msra.mxu0 0.0
    %254 = vmatprep.subr.mxu0 0.0
    %255 = vmatpush1.xpose.msra.mxu0 0.0
    %256 = vmatprep.subr.mxu0 0.0
    %257 = vmatpush1.xpose.msra.mxu0 0.0
    %258 = vmatprep.subr.mxu0 0.0
    %259 = vmatpush1.xpose.msra.mxu0 0.0
    %260 = vmatprep.subr.mxu0 0.0
    %261 = vmatpush1.xpose.msra.mxu0 0.0
    %262 = vmatprep.subr.mxu0 0.0
    %263 = vmatpush1.xpose.msra.mxu0 0.0
    %264 = vmatprep.subr.mxu0 0.0
    %265 = vmatpush1.xpose.msra.mxu0 0.0
    %266 = vmatprep.subr.mxu0 0.0
    %267 = vmatpush1.xpose.msra.mxu0 0.0
    %268 = vmatprep.subr.mxu0 0.0
    %269 = vmatpush1.xpose.msra.mxu0 0.0
    %270 = vmatprep.subr.mxu0 0.0
    %271 = vmatpush1.xpose.msra.mxu0 0.0
    %272 = vmatprep.subr.mxu0 0.0
    %273 = vmatpush1.xpose.msra.mxu0 0.0
    %274 = vmatprep.mubr.f32.mxu0 %v183
    %275 = vmatmul.mubr.f32.gmra.mrb[0].mxu0 %v175
    %v276 = vpop.f32.mrb[0].mxu0
    %v277 = vadd.f32 %v164, %v276
    %v278 = vpop.f32.mrb[0].mxu0
    %279 = vdwg.mxu0
    %280 = vmatprep.subr.mxu0 %v34
    %281 = vmatpush1.xpose.msra.mxu0 %v33
    %282 = vmatprep.subr.mxu0 %v42
    %283 = vmatpush1.xpose.msra.mxu0 %v41
    %284 = vmatprep.subr.mxu0 %v50
    %285 = vmatpush1.xpose.msra.mxu0 %v49
    %286 = vmatprep.subr.mxu0 %v58
    %287 = vmatpush1.xpose.msra.mxu0 %v57
    %288 = vmatprep.subr.mxu0 %v66
    %289 = vmatpush1.xpose.msra.mxu0 %v65
    %290 = vmatprep.subr.mxu0 %v74
    %291 = vmatpush1.xpose.msra.mxu0 %v73
    %292 = vmatprep.subr.mxu0 %v82
    %293 = vmatpush1.xpose.msra.mxu0 %v81
    %294 = vmatprep.subr.mxu0 %v90
    %295 = vmatpush1.xpose.msra.mxu0 %v89
    %296 = vmatprep.subr.mxu0 %v98
    %297 = vmatpush1.xpose.msra.mxu0 %v97
    %298 = vmatprep.subr.mxu0 %v106
    %299 = vmatpush1.xpose.msra.mxu0 %v105
    %300 = vmatprep.subr.mxu0 %v114
    %301 = vmatpush1.xpose.msra.mxu0 %v113
    %302 = vmatprep.subr.mxu0 %v122
    %303 = vmatpush1.xpose.msra.mxu0 %v121
    %304 = vmatprep.subr.mxu0 %v130
    %305 = vmatpush1.xpose.msra.mxu0 %v129
    %306 = vmatprep.subr.mxu0 %v138
    %307 = vmatpush1.xpose.msra.mxu0 %v137
    %308 = vmatprep.subr.mxu0 %v146
    %309 = vmatpush1.xpose.msra.mxu0 %v145
    %310 = vmatprep.subr.mxu0 %v154
    %311 = vmatpush1.xpose.msra.mxu0 %v153
    %312 = vmatprep.subr.mxu0 0.0
    %313 = vmatpush1.xpose.msra.mxu0 0.0
    %314 = vmatprep.subr.mxu0 0.0
    %315 = vmatpush1.xpose.msra.mxu0 0.0
    %316 = vmatprep.subr.mxu0 0.0
    %317 = vmatpush1.xpose.msra.mxu0 0.0
    %318 = vmatprep.subr.mxu0 0.0
    %319 = vmatpush1.xpose.msra.mxu0 0.0
    %320 = vmatprep.subr.mxu0 0.0
    %321 = vmatpush1.xpose.msra.mxu0 0.0
    %322 = vmatprep.subr.mxu0 0.0
    %323 = vmatpush1.xpose.msra.mxu0 0.0
    %324 = vmatprep.subr.mxu0 0.0
    %325 = vmatpush1.xpose.msra.mxu0 0.0
    %326 = vmatprep.subr.mxu0 0.0
    %327 = vmatpush1.xpose.msra.mxu0 0.0
    %328 = vmatprep.subr.mxu0 0.0
    %329 = vmatpush1.xpose.msra.mxu0 0.0
    %330 = vmatprep.subr.mxu0 0.0
    %331 = vmatpush1.xpose.msra.mxu0 0.0
    %332 = vmatprep.subr.mxu0 0.0
    %333 = vmatpush1.xpose.msra.mxu0 0.0
    %334 = vmatprep.subr.mxu0 0.0
    %335 = vmatpush1.xpose.msra.mxu0 0.0
    %336 = vmatprep.subr.mxu0 0.0
    %337 = vmatpush1.xpose.msra.mxu0 0.0
    %338 = vmatprep.subr.mxu0 0.0
    %339 = vmatpush1.xpose.msra.mxu0 0.0
    %340 = vmatprep.subr.mxu0 0.0
    %341 = vmatpush1.xpose.msra.mxu0 0.0
    %342 = vmatprep.subr.mxu0 0.0
    %343 = vmatpush1.xpose.msra.mxu0 0.0
    %344 = vmatprep.mubr.f32.mxu0 %v184
    %345 = vmatmul.mubr.f32.gmra.mrb[0].mxu0 %v182
    %v346 = vpop.f32.mrb[0].mxu0
    %v347 = vadd.f32 %v277, %v346
    %v348 = vpop.f32.mrb[0].mxu0
    %349 = vdwg.mxu0
    %350 = vmatprep.subr.mxu0 %v36
    %351 = vmatpush1.xpose.msra.mxu0 %v35
    %352 = vmatprep.subr.mxu0 %v44
    %353 = vmatpush1.xpose.msra.mxu0 %v43
    %354 = vmatprep.subr.mxu0 %v52
    %355 = vmatpush1.xpose.msra.mxu0 %v51
    %356 = vmatprep.subr.mxu0 %v60
    %357 = vmatpush1.xpose.msra.mxu0 %v59
    %358 = vmatprep.subr.mxu0 %v68
    %359 = vmatpush1.xpose.msra.mxu0 %v67
    %360 = vmatprep.subr.mxu0 %v76
    %361 = vmatpush1.xpose.msra.mxu0 %v75
    %362 = vmatprep.subr.mxu0 %v84
    %363 = vmatpush1.xpose.msra.mxu0 %v83
    %364 = vmatprep.subr.mxu0 %v92
    %365 = vmatpush1.xpose.msra.mxu0 %v91
    %366 = vmatprep.subr.mxu0 %v100
    %367 = vmatpush1.xpose.msra.mxu0 %v99
    %368 = vmatprep.subr.mxu0 %v108
    %369 = vmatpush1.xpose.msra.mxu0 %v107
    %370 = vmatprep.subr.mxu0 %v116
    %371 = vmatpush1.xpose.msra.mxu0 %v115
    %372 = vmatprep.subr.mxu0 %v124
    %373 = vmatpush1.xpose.msra.mxu0 %v123
    %374 = vmatprep.subr.mxu0 %v132
    %375 = vmatpush1.xpose.msra.mxu0 %v131
    %376 = vmatprep.subr.mxu0 %v140
    %377 = vmatpush1.xpose.msra.mxu0 %v139
    %378 = vmatprep.subr.mxu0 %v148
    %379 = vmatpush1.xpose.msra.mxu0 %v147
    %380 = vmatprep.subr.mxu0 %v156
    %381 = vmatpush1.xpose.msra.mxu0 %v155
    %382 = vmatprep.subr.mxu0 0.0
    %383 = vmatpush1.xpose.msra.mxu0 0.0
    %384 = vmatprep.subr.mxu0 0.0
    %385 = vmatpush1.xpose.msra.mxu0 0.0
    %386 = vmatprep.subr.mxu0 0.0
    %387 = vmatpush1.xpose.msra.mxu0 0.0
    %388 = vmatprep.subr.mxu0 0.0
    %389 = vmatpush1.xpose.msra.mxu0 0.0
    %390 = vmatprep.subr.mxu0 0.0
    %391 = vmatpush1.xpose.msra.mxu0 0.0
    %392 = vmatprep.subr.mxu0 0.0
    %393 = vmatpush1.xpose.msra.mxu0 0.0
    %394 = vmatprep.subr.mxu0 0.0
    %395 = vmatpush1.xpose.msra.mxu0 0.0
    %396 = vmatprep.subr.mxu0 0.0
    %397 = vmatpush1.xpose.msra.mxu0 0.0
    %398 = vmatprep.subr.mxu0 0.0
    %399 = vmatpush1.xpose.msra.mxu0 0.0
    %400 = vmatprep.subr.mxu0 0.0
    %401 = vmatpush1.xpose.msra.mxu0 0.0
    %402 = vmatprep.subr.mxu0 0.0
    %403 = vmatpush1.xpose.msra.mxu0 0.0
    %404 = vmatprep.subr.mxu0 0.0
    %405 = vmatpush1.xpose.msra.mxu0 0.0
    %406 = vmatprep.subr.mxu0 0.0
    %407 = vmatpush1.xpose.msra.mxu0 0.0
    %408 = vmatprep.subr.mxu0 0.0
    %409 = vmatpush1.xpose.msra.mxu0 0.0
    %410 = vmatprep.subr.mxu0 0.0
    %411 = vmatpush1.xpose.msra.mxu0 0.0
    %412 = vmatprep.subr.mxu0 0.0
    %413 = vmatpush1.xpose.msra.mxu0 0.0
    %414 = vmatprep.mubr.f32.mxu0 %v200
    %415 = vmatmul.mubr.f32.gmra.mrb[0].mxu0 %v192
    %v416 = vpop.f32.mrb[0].mxu0
    %v417 = vadd.f32 %v347, %v416
    %v418 = vpop.f32.mrb[0].mxu0
    %419 = vdwg.mxu0
    %420 = vmatprep.subr.mxu0 %v38
    %421 = vmatpush1.xpose.msra.mxu0 %v37
    %422 = vmatprep.subr.mxu0 %v46
    %423 = vmatpush1.xpose.msra.mxu0 %v45
    %424 = vmatprep.subr.mxu0 %v54
    %425 = vmatpush1.xpose.msra.mxu0 %v53
    %426 = vmatprep.subr.mxu0 %v62
    %427 = vmatpush1.xpose.msra.mxu0 %v61
    %428 = vmatprep.subr.mxu0 %v70
    %429 = vmatpush1.xpose.msra.mxu0 %v69
    %430 = vmatprep.subr.mxu0 %v78
    %431 = vmatpush1.xpose.msra.mxu0 %v77
    %432 = vmatprep.subr.mxu0 %v86
    %433 = vmatpush1.xpose.msra.mxu0 %v85
    %434 = vmatprep.subr.mxu0 %v94
    %435 = vmatpush1.xpose.msra.mxu0 %v93
    %436 = vmatprep.subr.mxu0 %v102
    %437 = vmatpush1.xpose.msra.mxu0 %v101
    %438 = vmatprep.subr.mxu0 %v110
    %439 = vmatpush1.xpose.msra.mxu0 %v109
    %440 = vmatprep.subr.mxu0 %v118
    %441 = vmatpush1.xpose.msra.mxu0 %v117
    %442 = vmatprep.subr.mxu0 %v126
    %443 = vmatpush1.xpose.msra.mxu0 %v125
    %444 = vmatprep.subr.mxu0 %v134
    %445 = vmatpush1.xpose.msra.mxu0 %v133
    %446 = vmatprep.subr.mxu0 %v142
    %447 = vmatpush1.xpose.msra.mxu0 %v141
    %448 = vmatprep.subr.mxu0 %v150
    %449 = vmatpush1.xpose.msra.mxu0 %v149
    %450 = vmatprep.subr.mxu0 %v158
    %451 = vmatpush1.xpose.msra.mxu0 %v157
    %452 = vmatprep.subr.mxu0 0.0
    %453 = vmatpush1.xpose.msra.mxu0 0.0
    %454 = vmatprep.subr.mxu0 0.0
    %455 = vmatpush1.xpose.msra.mxu0 0.0
    %456 = vmatprep.subr.mxu0 0.0
    %457 = vmatpush1.xpose.msra.mxu0 0.0
    %458 = vmatprep.subr.mxu0 0.0
    %459 = vmatpush1.xpose.msra.mxu0 0.0
    %460 = vmatprep.subr.mxu0 0.0
    %461 = vmatpush1.xpose.msra.mxu0 0.0
    %462 = vmatprep.subr.mxu0 0.0
    %463 = vmatpush1.xpose.msra.mxu0 0.0
    %464 = vmatprep.subr.mxu0 0.0
    %465 = vmatpush1.xpose.msra.mxu0 0.0
    %466 = vmatprep.subr.mxu0 0.0
    %467 = vmatpush1.xpose.msra.mxu0 0.0
    %468 = vmatprep.subr.mxu0 0.0
    %469 = vmatpush1.xpose.msra.mxu0 0.0
    %470 = vmatprep.subr.mxu0 0.0
    %471 = vmatpush1.xpose.msra.mxu0 0.0
    %472 = vmatprep.subr.mxu0 0.0
    %473 = vmatpush1.xpose.msra.mxu0 0.0
    %474 = vmatprep.subr.mxu0 0.0
    %475 = vmatpush1.xpose.msra.mxu0 0.0
    %476 = vmatprep.subr.mxu0 0.0
    %477 = vmatpush1.xpose.msra.mxu0 0.0
    %478 = vmatprep.subr.mxu0 0.0
    %479 = vmatpush1.xpose.msra.mxu0 0.0
    %480 = vmatprep.subr.mxu0 0.0
    %481 = vmatpush1.xpose.msra.mxu0 0.0
    %482 = vmatprep.subr.mxu0 0.0
    %483 = vmatpush1.xpose.msra.mxu0 0.0
    %484 = vmatprep.mubr.f32.mxu0 %v201
    %485 = vmatmul.mubr.f32.gmra.mrb[0].mxu0 %v199
    %v486 = vpop.f32.mrb[0].mxu0
    %v487 = vadd.f32 %v417, %v486
    %v488 = vpop.f32.mrb[0].mxu0
    %489 = vdwg.mxu0
    %v490 = vmul.f32 %v487, %v487
    %vm491 = vcmask 1041408
    %v492 = vsel %vm491, %v490, 0.0
    %493 = vadd.xlane.f32.xlu0 %v492
    %v494 = vpop.xlane.xlu0 %493
    %v495 = vrsqrt.pop %v494
    %v496 = vmul.f32 %v487, %v495
    %497 = vst [vmem:[#allocation5] sm:$0x3] %v496
    // Predicated region
    $region18: #{embed_forward.1} parent=1 // pred_check
      _
    $region19: #{embed_forward.1} parent=1 // pred_check_branch
      %499 = sbr.rel (0) target = $region21
    $region20: #{embed_forward.1} parent=1 // pred_region
      %s501 = ssub.s32 32, 32
      %502 = vsyncadd [#allocation4], %s501
      %s504 = sshll.u32 [#allocation5], 4
      %s505 = int_to_ptr.vmem [resolvable:$true] %s504
      %507 = dma.vmem_to_hbm [thread:$0]  %s505, 32, %s3, [#allocation4]
    $region21: #{embed_forward.1} parent=1 // pred_fallthru
      _
    // Predicated region
    $region22: #{embed_forward.1} parent=1 // pred_check
      _
    $region23: #{embed_forward.1} parent=1 // pred_check_branch
      %509 = sbr.rel (0) target = $region25
    $region24: #{embed_forward.1} parent=1 // pred_region
      %510 = dma.done [#allocation4], 32
    $region25: #{embed_forward.1} parent=1 // pred_fallthru
      _
    %511 = vsyncpa [#allocation3], 1
    %512 = vsyncpa [#allocation4], 1

</llo_original>
